<compile_context>
chip_gen: v6e
topology: v6e:2x2x1
jax: 0.10.0
libtpu: 0.0.40
codegen_flags: <defaults>
</compile_context>

<pallas_src>
import jax
import jax.numpy as jnp
from jax import lax
from jax.experimental import pallas as pl
from jax.experimental.pallas import tpu as pltpu

_DROPOUT_P = 0.3
_SCALE = 2.0 / (1.0 - _DROPOUT_P)          # fold (x*2)*y and 1/(1-p) into one constant
_KEEP_THRESH = int(round(_DROPOUT_P * (1 << 31)))   # compare 31-bit hash vs p*2^31

_LANES = 512          # lane-dense slab width (multiple of 128)
_TILE_ROWS = 1024     # rows per grid step -> 2 MiB f32 per operand tile


def _i32(v):
    """Python int -> value representable as int32 (two's complement)."""
    v &= 0xFFFFFFFF
    return v - (1 << 32) if v >= (1 << 31) else v


_GOLDEN = _i32(0x9E3779B9)
_MIX1 = _i32(0x85EBCA6B)
_MIX2 = _i32(0xC2B2AE35)


def _dropout_mul_kernel(seed_ref, x_ref, y_ref, o_ref):
    tile_r, w = x_ref.shape
    pid = pl.program_id(0)

    # Global linear element index of every element in this tile.
    row = lax.broadcasted_iota(jnp.int32, (tile_r, w), 0)
    col = lax.broadcasted_iota(jnp.int32, (tile_r, w), 1)
    lin = (pid * tile_r + row) * w + col

    # Counter-based hash (murmur3 fmix32 flavour); int32 arithmetic wraps, which
    # is exactly what we want. Distinct per element, per seed, per tile.
    h = lin * jnp.int32(_GOLDEN) + seed_ref[0]
    h = h ^ lax.shift_right_logical(h, jnp.int32(16))
    h = h * jnp.int32(_MIX1)
    h = h ^ lax.shift_right_logical(h, jnp.int32(13))
    h = h * jnp.int32(_MIX2)
    h = h ^ lax.shift_right_logical(h, jnp.int32(16))
    pos = h & jnp.int32(0x7FFFFFFF)                 # uniform in [0, 2^31)
    keep = pos >= jnp.int32(_KEEP_THRESH)           # dropped with prob p

    prod = x_ref[...].astype(jnp.float32) * y_ref[...].astype(jnp.float32)
    scaled = prod * jnp.float32(_SCALE)
    o_ref[...] = jnp.where(keep, scaled, jnp.float32(0.0)).astype(o_ref.dtype)


@jax.jit
def model_forward(x, y, seed):
    """dropout((x*2)*y, p=0.3) with inverted-scale (training mode)."""
    out_dtype = jnp.result_type(x.dtype, y.dtype)
    orig_shape = x.shape
    total = x.size

    # Flatten to a lane-dense slab; pad rows up to a multiple of 8 so tiled
    # blocks satisfy the (8, 128) divisibility rule.
    rows = pl.cdiv(total, _LANES)
    rows = ((rows + 7) // 8) * 8
    padded = rows * _LANES

    xf = x.reshape(-1)
    yf = y.reshape(-1)
    if padded != total:
        pad = padded - total
        xf = jnp.pad(xf, (0, pad))
        yf = jnp.pad(yf, (0, pad))
    x2 = xf.reshape(rows, _LANES)   # native dtype; cast happens inside the kernel
    y2 = yf.reshape(rows, _LANES)

    tile_r = min(_TILE_ROWS, rows)  # both multiples of 8
    n_tiles = pl.cdiv(rows, tile_r)

    seed_arr = jnp.asarray([seed], dtype=jnp.int32)

    bytes_accessed = padded * (x2.dtype.itemsize + y2.dtype.itemsize
                               + jnp.dtype(out_dtype).itemsize)

    out = pl.pallas_call(
        _dropout_mul_kernel,
        out_shape=jax.ShapeDtypeStruct((rows, _LANES), out_dtype),
        grid_spec=pltpu.PrefetchScalarGridSpec(
            num_scalar_prefetch=1,
            grid=(n_tiles,),
            in_specs=[
                pl.BlockSpec((tile_r, _LANES), lambda i, seed: (i, 0)),
                pl.BlockSpec((tile_r, _LANES), lambda i, seed: (i, 0)),
            ],
            out_specs=pl.BlockSpec((tile_r, _LANES), lambda i, seed: (i, 0)),
        ),
        compiler_params=pltpu.CompilerParams(
            # Row tiles are independent (mask derived from global element index,
            # not per-call PRNG state) -> shard across TensorCores on v7x.
            dimension_semantics=("parallel",),
        ),
        cost_estimate=pl.CostEstimate(
            flops=3 * padded, transcendentals=0, bytes_accessed=bytes_accessed),
    )(seed_arr, x2, y2)

    return out.reshape(-1)[:total].reshape(orig_shape)


if __name__ == "__main__":
    key = jax.random.PRNGKey(0)
    kx, ky = jax.random.split(key)
    # Small NCHW-shaped inputs consistent with the module.
    x = jax.random.normal(kx, (2, 4, 16, 16), dtype=jnp.float32)
    y = jax.random.normal(ky, (2, 4, 16, 16), dtype=jnp.float32)

    out = model_forward(x, y, 1234)
    jax.block_until_ready(out)

    assert out.shape == x.shape and out.dtype == jnp.float32

    # Surviving elements must equal (x*2*y)/(1-p); roughly 30% dropped.
    expected = (x * 2.0 * y) / (1.0 - _DROPOUT_P)
    kept = out != 0.0
    assert jnp.allclose(jnp.where(kept, out, 0.0),
                        jnp.where(kept, expected, 0.0),
                        rtol=1e-5, atol=1e-5)
    drop_frac = 1.0 - float(jnp.mean(kept.astype(jnp.float32)))
    assert 0.2 < drop_frac < 0.4, f"unexpected drop fraction {drop_frac}"

    print("KERNEL_OK")
</pallas_src>

<mosaic_0001>
module attributes {stable_mosaic.version = 11 : i64} {
  func.func @_dropout_mul_kernel(%arg0: i32, %arg1: memref<1xi32, #tpu.memory_space<smem>>, %arg2: memref<8x512xf32, #tpu.memory_space<vmem>>, %arg3: memref<8x512xf32, #tpu.memory_space<vmem>>, %arg4: memref<8x512xf32, #tpu.memory_space<vmem>>) attributes {dimension_semantics = [#tpu.dimension_semantics<parallel>], iteration_bounds = array<i64: 1>, scalar_prefetch = 1 : i64, scratch_operands = 0 : i64, tpu.core_type = #tpu.core_type<tc>, window_params = [{transform_indices = @transform_0, window_bounds = array<i64: 8, 512>}, {transform_indices = @transform_1, window_bounds = array<i64: 8, 512>}, {transform_indices = @transform_2, window_bounds = array<i64: 8, 512>}]} {
    %0 = tpu.iota {dimensions = array<i32: 0>} : vector<8x512xi32>
    %1 = tpu.iota {dimensions = array<i32: 1>} : vector<8x512xi32>
    %c8_i32 = arith.constant 8 : i32
    %2 = arith.muli %arg0, %c8_i32 : i32
    %3 = vector.broadcast %2 : i32 to vector<8x512xi32>
    %4 = arith.addi %3, %0 : vector<8x512xi32>
    %c512_i32 = arith.constant 512 : i32
    %5 = vector.broadcast %c512_i32 : i32 to vector<8x512xi32>
    %6 = arith.muli %4, %5 : vector<8x512xi32>
    %7 = arith.addi %6, %1 : vector<8x512xi32>
    %c-1640531527_i32 = arith.constant -1640531527 : i32
    %8 = vector.broadcast %c-1640531527_i32 : i32 to vector<8x512xi32>
    %9 = arith.muli %7, %8 : vector<8x512xi32>
    %c0 = arith.constant 0 : index
    %10 = memref.load %arg1[%c0] : memref<1xi32, #tpu.memory_space<smem>>
    %11 = vector.broadcast %10 : i32 to vector<8x512xi32>
    %12 = arith.addi %9, %11 : vector<8x512xi32>
    %c16_i32 = arith.constant 16 : i32
    %13 = vector.broadcast %c16_i32 : i32 to vector<8x512xi32>
    %14 = arith.shrui %12, %13 : vector<8x512xi32>
    %15 = arith.xori %12, %14 : vector<8x512xi32>
    %c-2048144789_i32 = arith.constant -2048144789 : i32
    %16 = vector.broadcast %c-2048144789_i32 : i32 to vector<8x512xi32>
    %17 = arith.muli %15, %16 : vector<8x512xi32>
    %c13_i32 = arith.constant 13 : i32
    %18 = vector.broadcast %c13_i32 : i32 to vector<8x512xi32>
    %19 = arith.shrui %17, %18 : vector<8x512xi32>
    %20 = arith.xori %17, %19 : vector<8x512xi32>
    %c-1028477387_i32 = arith.constant -1028477387 : i32
    %21 = vector.broadcast %c-1028477387_i32 : i32 to vector<8x512xi32>
    %22 = arith.muli %20, %21 : vector<8x512xi32>
    %c16_i32_0 = arith.constant 16 : i32
    %23 = vector.broadcast %c16_i32_0 : i32 to vector<8x512xi32>
    %24 = arith.shrui %22, %23 : vector<8x512xi32>
    %25 = arith.xori %22, %24 : vector<8x512xi32>
    %c2147483647_i32 = arith.constant 2147483647 : i32
    %26 = vector.broadcast %c2147483647_i32 : i32 to vector<8x512xi32>
    %27 = arith.andi %25, %26 : vector<8x512xi32>
    %c644245094_i32 = arith.constant 644245094 : i32
    %28 = vector.broadcast %c644245094_i32 : i32 to vector<8x512xi32>
    %29 = arith.cmpi sge, %27, %28 : vector<8x512xi32>
    %c0_1 = arith.constant 0 : index
    %c0_2 = arith.constant 0 : index
    %30 = vector.load %arg2[%c0_1, %c0_2] : memref<8x512xf32, #tpu.memory_space<vmem>>, vector<8x512xf32>
    %c0_3 = arith.constant 0 : index
    %c0_4 = arith.constant 0 : index
    %31 = vector.load %arg3[%c0_3, %c0_4] : memref<8x512xf32, #tpu.memory_space<vmem>>, vector<8x512xf32>
    %32 = arith.mulf %30, %31 : vector<8x512xf32>
    %cst = arith.constant 2.85714293 : f32
    %33 = vector.broadcast %cst : f32 to vector<8x512xf32>
    %34 = arith.mulf %32, %33 : vector<8x512xf32>
    %cst_5 = arith.constant 0.000000e+00 : f32
    %35 = vector.broadcast %cst_5 : f32 to vector<8x512xf32>
    %36 = arith.select %29, %34, %35 : vector<8x512xi1>, vector<8x512xf32>
    %c0_6 = arith.constant 0 : index
    %c0_7 = arith.constant 0 : index
    %37 = vector.load %arg4[%c0_6, %c0_7] : memref<8x512xf32, #tpu.memory_space<vmem>>, vector<8x512xf32>
    tpu.vector_store %arg4[%c0_6, %c0_7], %36 {strides = array<i32>} : memref<8x512xf32, #tpu.memory_space<vmem>>, vector<8x512xf32>,
    return
  }
  func.func @transform_0(%arg0: i32, %arg1: memref<1xi32, #tpu.memory_space<smem>>) -> (i32, i32) {
    %c0_i32 = arith.constant 0 : i32
    %c0_i32_0 = arith.constant 0 : i32
    return %arg0, %c0_i32 : i32, i32
  }
  func.func @transform_1(%arg0: i32, %arg1: memref<1xi32, #tpu.memory_space<smem>>) -> (i32, i32) {
    %c0_i32 = arith.constant 0 : i32
    %c0_i32_0 = arith.constant 0 : i32
    return %arg0, %c0_i32 : i32, i32
  }
  func.func @transform_2(%arg0: i32, %arg1: memref<1xi32, #tpu.memory_space<smem>>) -> (i32, i32) {
    %c0_i32 = arith.constant 0 : i32
    %c0_i32_0 = arith.constant 0 : i32
    return %arg0, %c0_i32 : i32, i32
  }
}

</mosaic_0001>

<llo_original>
// kernel: model_forward.1
$region0: #{model_forward.1}
  #allocation0 [shape = 'u32[]', space=smem, size = 0x4, offset = 0x4, fixed_abs, tag = 'smem constant byte address 0x4 - core index']
  #allocation1 [shape = 'u32[144,128]{1,0:T(1,128)}', space=vmem, size = 0x12000, scoped, tag = 'internal scratch']
  #allocation2 [shape = 's32[1]{0}', space=sflag, size = 0x4, scoped, tag = 'scoped memory for model_forward.1']
  #allocation3 [shape = 's32[1]{0:T(128)S(6)}', space=smem, size = 0x200, scoped, tag = 'prefetched SMEM operand 0']
  %s0 = inlined_call_operand.<no memory space> [shape: s32[1], index: 0, kind: input, shape index: {}]
  %s1 = inlined_call_operand.vmem [shape: f32[8,512], index: 1, kind: input, shape index: {}]
  %s2 = inlined_call_operand.vmem [shape: f32[8,512], index: 2, kind: input, shape index: {}]
  %s3 = inlined_call_operand.vmem [shape: f32[8,512], index: 3, kind: output, shape index: {}]
  %s4 = sld [smem:[#allocation0]]
  $region18: #{model_forward.1} parent=0
    _
  %s6 = ssub.s32 1, %s4
  %s7 = scalar_select 0, %s6, %s4
  %8 = sst [smem:[#allocation3]] %s0
  // Predicated region
  $region2: #{model_forward.1} parent=0 // pred_check
    _
  $region3: #{model_forward.1} parent=0 // pred_check_branch
    %10 = sbr.rel (0) target = $region5
  $region4: #{model_forward.1} parent=0 // pred_region
    _
  $region5: #{model_forward.1} parent=0 // pred_fallthru
    _
  // Predicated region
  $region6: #{model_forward.1} parent=0 // pred_check
    _
  $region7: #{model_forward.1} parent=0 // pred_check_branch
    %12 = sbr.rel (0) target = $region9
  $region8: #{model_forward.1} parent=0 // pred_region
    _
  $region9: #{model_forward.1} parent=0 // pred_fallthru
    _
  %v13 = vlaneseq
  %v14 = vshrl.u32 %v13, 7
  %v15 = vlaneseq
  %v16 = vand.u32 %v15, 127
  %v17 = vadd.s32 %v16, 128
  %v18 = vadd.s32 %v16, 256
  %v19 = vadd.s32 %v16, 384
  %s20 = smul.u32 0, 8
  %v21 = vstv %s20
  %v22 = vadd.s32 %v21, %v14
  %v23 = vmul.u32 %v22, 512
  %v24 = vadd.s32 %v23, %v16
  %v25 = vadd.s32 %v23, %v17
  %v26 = vadd.s32 %v23, %v18
  %v27 = vadd.s32 %v23, %v19
  %v28 = vmul.u32 %v24, 2654435769
  %v29 = vmul.u32 %v25, 2654435769
  %v30 = vmul.u32 %v26, 2654435769
  %v31 = vmul.u32 %v27, 2654435769
  %s32 = sld [smem:[#allocation3]]
  %v33 = vstv %s32
  %v34 = vadd.s32 %v28, %v33
  %v35 = vadd.s32 %v29, %v33
  %v36 = vadd.s32 %v30, %v33
  %v37 = vadd.s32 %v31, %v33
  %v38 = vshrl.u32 %v34, 16
  %v39 = vshrl.u32 %v35, 16
  %v40 = vshrl.u32 %v36, 16
  %v41 = vshrl.u32 %v37, 16
  %v42 = vxor.u32 %v34, %v38
  %v43 = vxor.u32 %v35, %v39
  %v44 = vxor.u32 %v36, %v40
  %v45 = vxor.u32 %v37, %v41
  %v46 = vmul.u32 %v42, 2246822507
  %v47 = vmul.u32 %v43, 2246822507
  %v48 = vmul.u32 %v44, 2246822507
  %v49 = vmul.u32 %v45, 2246822507
  %v50 = vshrl.u32 %v46, 13
  %v51 = vshrl.u32 %v47, 13
  %v52 = vshrl.u32 %v48, 13
  %v53 = vshrl.u32 %v49, 13
  %v54 = vxor.u32 %v46, %v50
  %v55 = vxor.u32 %v47, %v51
  %v56 = vxor.u32 %v48, %v52
  %v57 = vxor.u32 %v49, %v53
  %v58 = vmul.u32 %v54, 3266489909
  %v59 = vmul.u32 %v55, 3266489909
  %v60 = vmul.u32 %v56, 3266489909
  %v61 = vmul.u32 %v57, 3266489909
  %v62 = vshrl.u32 %v58, 16
  %v63 = vshrl.u32 %v59, 16
  %v64 = vshrl.u32 %v60, 16
  %v65 = vshrl.u32 %v61, 16
  %v66 = vxor.u32 %v58, %v62
  %v67 = vxor.u32 %v59, %v63
  %v68 = vxor.u32 %v60, %v64
  %v69 = vxor.u32 %v61, %v65
  %v70 = vand.u32 %v66, 2147483647
  %v71 = vand.u32 %v67, 2147483647
  %v72 = vand.u32 %v68, 2147483647
  %v73 = vand.u32 %v69, 2147483647
  %vm74 = vcmp.ge.s32.totalorder %v70, 644245094
  %vm75 = vcmp.ge.s32.totalorder %v71, 644245094
  %vm76 = vcmp.ge.s32.totalorder %v72, 644245094
  %vm77 = vcmp.ge.s32.totalorder %v73, 644245094
  %v78 = vld [vmem:[%s1] sm:$0xff]
  %v79 = vld [vmem:[%s1 + $0x8] sm:$0xff]
  %v80 = vld [vmem:[%s1 + $0x10] sm:$0xff]
  %v81 = vld [vmem:[%s1 + $0x18] sm:$0xff]
  %v82 = vld [vmem:[%s2] sm:$0xff]
  %v83 = vld [vmem:[%s2 + $0x8] sm:$0xff]
  %v84 = vld [vmem:[%s2 + $0x10] sm:$0xff]
  %v85 = vld [vmem:[%s2 + $0x18] sm:$0xff]
  %v86 = vmul.f32 %v78, %v82
  %v87 = vmul.f32 %v79, %v83
  %v88 = vmul.f32 %v80, %v84
  %v89 = vmul.f32 %v81, %v85
  %v90 = vmul.f32 %v86, 2.857143
  %v91 = vmul.f32 %v87, 2.857143
  %v92 = vmul.f32 %v88, 2.857143
  %v93 = vmul.f32 %v89, 2.857143
  %v94 = vsel %vm74, %v90, 0.0
  %v95 = vsel %vm75, %v91, 0.0
  %v96 = vsel %vm76, %v92, 0.0
  %v97 = vsel %vm77, %v93, 0.0
  %98 = vst [vmem:[%s3] sm:$0xff] %v94
  %99 = vst [vmem:[%s3 + $0x8] sm:$0xff] %v95
  %100 = vst [vmem:[%s3 + $0x10] sm:$0xff] %v96
  %101 = vst [vmem:[%s3 + $0x18] sm:$0xff] %v97
  // Predicated region
  $region10: #{model_forward.1} parent=0 // pred_check
    _
  $region11: #{model_forward.1} parent=0 // pred_check_branch
    %103 = sbr.rel (0) target = $region13
  $region12: #{model_forward.1} parent=0 // pred_region
    _
  $region13: #{model_forward.1} parent=0 // pred_fallthru
    _
  // Predicated region
  $region14: #{model_forward.1} parent=0 // pred_check
    _
  $region15: #{model_forward.1} parent=0 // pred_check_branch
    %105 = sbr.rel (0) target = $region17
  $region16: #{model_forward.1} parent=0 // pred_region
    _
  $region17: #{model_forward.1} parent=0 // pred_fallthru
    _

</llo_original>
